<compile_context>
chip_gen: v5e
topology: v5e:2x2
jax: 0.10.0
libtpu: 0.0.40
codegen_flags: <defaults>
</compile_context>

<pallas_src>
import functools

import jax
import jax.numpy as jnp
from jax.experimental import pallas as pl
from jax.experimental.pallas import tpu as pltpu


def _mid_prob_kernel(x_ref, o_ref, *, tb, td, inv_b, inv_d, exclusive):
    # tb/td/inv_b/inv_d are Python floats -> compile-time literals (no captured
    # tracer constants). Compute natively in the storage dtype (f32 or bf16):
    # weak-typed literals keep bf16 math in bf16 (halves VALU work on v6e/v7x);
    # Mosaic transparently widens to f32 on v5e.
    x = x_ref[...]
    prob_b = jnp.clip((x - tb) * inv_b, 0.0, 1.0)   # BrightProb
    prob_d = jnp.clip((x - td) * inv_d, 0.0, 1.0)   # DarkProb
    if exclusive:
        # threshold_b >= threshold_d: at most one of prob_b / prob_d is nonzero,
        # so 1 - prob_d - prob_b == 1 - max(prob_b, prob_d) and is already in
        # [0, 1] -> the outer clamp is redundant.
        out = 1.0 - jnp.maximum(prob_b, prob_d)
    else:
        out = jnp.clip(1.0 - prob_d - prob_b, 0.0, 1.0)
    o_ref[...] = out.astype(o_ref.dtype)


def _mid_prob_jnp(x, *, tb, td, inv_b, inv_d):
    # Tiny-tail (< 128 elements) fallback; plain XLA elementwise.
    prob_b = jnp.clip((x - tb) * inv_b, 0.0, 1.0)
    prob_d = jnp.clip((x - td) * inv_d, 0.0, 1.0)
    return jnp.clip(1.0 - prob_d - prob_b, 0.0, 1.0)


def _default_block_bytes():
    # Generation-aware block size: v7x (64 MiB VMEM, 3.2 TB/s HBM) prefers
    # bigger blocks to amortize per-step overhead; 4 MiB is plenty on v5e/v6e.
    try:
        info = pltpu.get_tpu_info()
        vmem = getattr(info, "vmem_capacity_bytes", 128 << 20)
        return (6 << 20) if vmem <= (64 << 20) else (4 << 20)
    except Exception:
        return 4 << 20


def mid_prob(x, threshold_b=0.75, threshold_d=0.25,
             target_block_bytes=None, donate_input=False):
    """x: float array of any shape (e.g. NCHW). Returns same shape/dtype.

    Note: like the PyTorch module, threshold_d == 0 divides by zero (here it
    fails when precomputing the reciprocal).
    """
    orig_shape = x.shape
    orig_dtype = x.dtype
    n = x.size
    if n == 0:
        return x

    # Keep native storage dtype for f32/bf16 (halves HBM bytes for bf16).
    # Other dtypes pay one cast each way (rare path, kept simple & safe since
    # not every generation can load/store them natively in Pallas).
    if orig_dtype in (jnp.float32, jnp.bfloat16):
        work_dtype = orig_dtype
    else:
        work_dtype = jnp.float32
    itemsize = jnp.dtype(work_dtype).itemsize

    tb = float(threshold_b)
    td = float(threshold_d)
    inv_b = 1.0 / (1.0 - tb)
    inv_d = 1.0 / (0.0 - td)
    exclusive = tb >= td   # prob_b / prob_d mutually exclusive -> cheaper tail

    if target_block_bytes is None:
        target_block_bytes = _default_block_bytes()

    # Wide lane-dense last dim (large multiple of 128) -> unmasked vst stores.
    lanes = 128
    for w in (4096, 2048, 1024, 512, 256, 128):
        if n % w == 0:
            lanes = w
            break

    xf = jnp.ravel(x)
    if xf.dtype != work_dtype:
        xf = xf.astype(work_dtype)

    n_main = (n // lanes) * lanes

    kernel = functools.partial(
        _mid_prob_kernel,
        tb=tb, td=td, inv_b=inv_b, inv_d=inv_d, exclusive=exclusive)

    pieces = []
    if n_main > 0:
        rows = n_main // lanes
        x2d = xf[:n_main].reshape(rows, lanes)

        # ~target_block_bytes per block; in+out double-buffering ~4x live VMEM,
        # well under the explicit 48 MiB vmem limit on every generation.
        row_tile = max(8, (target_block_bytes // (lanes * itemsize)) // 8 * 8)
        # Slabs > 2 MiB always get >= 4 blocks so v7x's two TensorCores both
        # get work and DMA overlaps compute (harmless on single-TC v5e/v6e).
        if rows * lanes * itemsize > (2 << 20) and rows >= 32:
            row_tile = min(row_tile, max(8, (rows // 4) // 8 * 8))
        if rows <= row_tile or rows < 8:
            row_tile = rows   # single block (block shape == array shape is legal)
        grid = (pl.cdiv(rows, row_tile),)

        out2d = pl.pallas_call(
            kernel,
            out_shape=jax.ShapeDtypeStruct((rows, lanes), work_dtype),
            grid_spec=pltpu.PrefetchScalarGridSpec(
                num_scalar_prefetch=0,
                grid=grid,
                in_specs=[pl.BlockSpec((row_tile, lanes), lambda i: (i, 0))],
                out_specs=pl.BlockSpec((row_tile, lanes), lambda i: (i, 0)),
            ),
            compiler_params=pltpu.CompilerParams(
                dimension_semantics=("parallel",),
                vmem_limit_bytes=48 * 1024 * 1024,
            ),
            cost_estimate=pl.CostEstimate(
                flops=8 * n_main,
                transcendentals=0,
                bytes_accessed=2 * n_main * itemsize,
            ),
            input_output_aliases=({0: 0} if donate_input else {}),
        )(x2d)
        pieces.append(out2d.reshape(-1))

    if n_main < n:
        # < `lanes` trailing elements: trivial XLA elementwise instead of the
        # full-array pad/concat + slice passes of the previous version.
        pieces.append(_mid_prob_jnp(xf[n_main:], tb=tb, td=td,
                                    inv_b=inv_b, inv_d=inv_d))

    out = pieces[0] if len(pieces) == 1 else jnp.concatenate(pieces)
    out = out.reshape(orig_shape)
    if out.dtype != orig_dtype:
        out = out.astype(orig_dtype)
    return out


def mid_prob_ref(x, tb=0.75, td=0.25):
    x = x.astype(jnp.float32)
    prob_b = jnp.clip((x - tb) / (1.0 - tb), 0.0, 1.0)
    prob_d = jnp.clip((x - td) / (0.0 - td), 0.0, 1.0)
    return jnp.clip(1.0 - prob_d - prob_b, 0.0, 1.0)


if __name__ == "__main__":
    key = jax.random.PRNGKey(0)

    # 1) NCHW f32 input, values in [0, 1] like an image intensity map.
    x = jax.random.uniform(key, (2, 4, 16, 16), dtype=jnp.float32)
    out = jax.block_until_ready(mid_prob(x))
    ref = mid_prob_ref(x)
    assert out.shape == x.shape and out.dtype == x.dtype
    assert jnp.max(jnp.abs(out - ref)) < 1e-6

    # 2) Non-128-divisible size exercises the prefix+tail path.
    k2 = jax.random.PRNGKey(1)
    y = jax.random.uniform(k2, (2, 3, 5, 7), dtype=jnp.float32)
    out_y = jax.block_until_ready(mid_prob(y))
    assert jnp.max(jnp.abs(out_y - mid_prob_ref(y))) < 1e-6

    # 3) bf16 input stays bf16 end-to-end (halved HBM traffic, native bf16 math).
    xb = x.astype(jnp.bfloat16)
    out_b = jax.block_until_ready(mid_prob(xb))
    assert out_b.dtype == jnp.bfloat16
    assert jnp.max(jnp.abs(out_b.astype(jnp.float32) - mid_prob_ref(xb))) < 2e-2

    # 4) Non-default thresholds with tb < td exercise the clamped (non-exclusive) path.
    out_t = jax.block_until_ready(mid_prob(x, threshold_b=0.3, threshold_d=0.6))
    ref_t = mid_prob_ref(x, tb=0.3, td=0.6)
    assert jnp.max(jnp.abs(out_t - ref_t)) < 1e-6

    print("KERNEL_OK")
</pallas_src>

<mosaic_0001>
module attributes {stable_mosaic.version = 11 : i64} {
  func.func @_mid_prob_kernel(%arg0: i32, %arg1: memref<1x2048xf32, #tpu.memory_space<vmem>>, %arg2: memref<1x2048xf32, #tpu.memory_space<vmem>>) attributes {dimension_semantics = [#tpu.dimension_semantics<parallel>], iteration_bounds = array<i64: 1>, scalar_prefetch = 0 : i64, scratch_operands = 0 : i64, tpu.core_type = #tpu.core_type<tc>, window_params = [{transform_indices = @transform_0, window_bounds = array<i64: 1, 2048>}, {transform_indices = @transform_1, window_bounds = array<i64: 1, 2048>}]} {
    %c0 = arith.constant 0 : index
    %c0_0 = arith.constant 0 : index
    %0 = vector.load %arg1[%c0, %c0_0] : memref<1x2048xf32, #tpu.memory_space<vmem>>, vector<1x2048xf32>
    %cst = arith.constant 7.500000e-01 : f32
    %1 = vector.broadcast %cst : f32 to vector<1x2048xf32>
    %2 = arith.subf %0, %1 : vector<1x2048xf32>
    %cst_1 = arith.constant 4.000000e+00 : f32
    %3 = vector.broadcast %cst_1 : f32 to vector<1x2048xf32>
    %4 = arith.mulf %2, %3 : vector<1x2048xf32>
    %cst_2 = arith.constant 0.000000e+00 : f32
    %cst_3 = arith.constant 1.000000e+00 : f32
    %5 = vector.broadcast %cst_2 : f32 to vector<1x2048xf32>
    %6 = arith.maximumf %5, %4 : vector<1x2048xf32>
    %7 = vector.broadcast %cst_3 : f32 to vector<1x2048xf32>
    %8 = arith.minimumf %7, %6 : vector<1x2048xf32>
    %cst_4 = arith.constant 2.500000e-01 : f32
    %9 = vector.broadcast %cst_4 : f32 to vector<1x2048xf32>
    %10 = arith.subf %0, %9 : vector<1x2048xf32>
    %cst_5 = arith.constant -4.000000e+00 : f32
    %11 = vector.broadcast %cst_5 : f32 to vector<1x2048xf32>
    %12 = arith.mulf %10, %11 : vector<1x2048xf32>
    %cst_6 = arith.constant 0.000000e+00 : f32
    %cst_7 = arith.constant 1.000000e+00 : f32
    %13 = vector.broadcast %cst_6 : f32 to vector<1x2048xf32>
    %14 = arith.maximumf %13, %12 : vector<1x2048xf32>
    %15 = vector.broadcast %cst_7 : f32 to vector<1x2048xf32>
    %16 = arith.minimumf %15, %14 : vector<1x2048xf32>
    %17 = arith.maximumf %8, %16 : vector<1x2048xf32>
    %cst_8 = arith.constant 1.000000e+00 : f32
    %18 = vector.broadcast %cst_8 : f32 to vector<1x2048xf32>
    %19 = arith.subf %18, %17 : vector<1x2048xf32>
    %c0_9 = arith.constant 0 : index
    %c0_10 = arith.constant 0 : index
    %20 = vector.load %arg2[%c0_9, %c0_10] : memref<1x2048xf32, #tpu.memory_space<vmem>>, vector<1x2048xf32>
    tpu.vector_store %arg2[%c0_9, %c0_10], %19 {strides = array<i32>} : memref<1x2048xf32, #tpu.memory_space<vmem>>, vector<1x2048xf32>,
    return
  }
  func.func @transform_0(%arg0: i32) -> (i32, i32) {
    %c0_i32 = arith.constant 0 : i32
    %c0_i32_0 = arith.constant 0 : i32
    return %arg0, %c0_i32 : i32, i32
  }
  func.func @transform_1(%arg0: i32) -> (i32, i32) {
    %c0_i32 = arith.constant 0 : i32
    %c0_i32_0 = arith.constant 0 : i32
    return %arg0, %c0_i32 : i32, i32
  }
}

</mosaic_0001>

<llo_original>
// kernel: tpu_custom_call.1
$region0: #{tpu_custom_call.1}
  #allocation0 [shape = 'u32[]', space=smem, size = 0x4, offset = 0x4, fixed_abs, tag = 'smem constant byte address 0x4 - core index']
  #allocation1 [shape = 'u32[72,128]{1,0:T(1,128)}', space=vmem, size = 0x9000, scoped, tag = 'internal scratch']
  %s0 = inlined_call_operand.hbm [shape: f32[1,2048], index: 0, kind: input, shape index: {}]
  %s1 = inlined_call_operand.hbm [shape: f32[1,2048], index: 1, kind: output, shape index: {}]
  %s2 = sld [smem:[#allocation0]]
  $region18: #{tpu_custom_call.1} parent=0
    _
  %s4 = ssub.s32 1, %s2
  %s5 = scalar_select 0, %s4, %s2
  $region1: #{tpu_custom_call.1} parent=0
    #allocation2 [shape = 'u8[8192]{0}', space=vmem, size = 0x2000, scoped, tag = 'input window, operand 0, single buffered']
    #allocation3 [shape = 's32[1]{0}', space=sflag, size = 0x4, scoped, tag = 'scoped memory for tpu_custom_call.1']
    #allocation4 [shape = 's32[1]{0}', space=sflag, size = 0x4, scoped, tag = 'scoped memory for tpu_custom_call.1']
    #allocation5 [shape = 'u8[8192]{0}', space=vmem, size = 0x2000, scoped, tag = 'output window, operand 0, single buffered']
    %6 = vsyncpa [#allocation3], 0
    %7 = vsyncpa [#allocation4], 0
    // Predicated region
    $region2: #{tpu_custom_call.1} parent=1 // pred_check
      _
    $region3: #{tpu_custom_call.1} parent=1 // pred_check_branch
      %9 = sbr.rel (0) target = $region5
    $region4: #{tpu_custom_call.1} parent=1 // pred_region
      %11 = vsyncadd [#allocation3], 0
      %s13 = sshll.u32 %s0, 4
      %s14 = int_to_ptr.hbm [resolvable:$true] %s13
      %s15 = sshll.u32 [#allocation2], 4
      %s16 = int_to_ptr.vmem [resolvable:$true] %s15
      %18 = dma.hbm_to_vmem [thread:$0]  %s14, 256, %s16, [#allocation3]
    $region5: #{tpu_custom_call.1} parent=1 // pred_fallthru
      _
    // Predicated region
    $region6: #{tpu_custom_call.1} parent=1 // pred_check
      _
    $region7: #{tpu_custom_call.1} parent=1 // pred_check_branch
      %20 = sbr.rel (0) target = $region9
    $region8: #{tpu_custom_call.1} parent=1 // pred_region
      %22 = dma.done [#allocation3], 256
    $region9: #{tpu_custom_call.1} parent=1 // pred_fallthru
      _
    %v23 = vld [vmem:[#allocation2] sm:$0xff]
    %v24 = vld [vmem:[#allocation2 + $0x8] sm:$0xff]
    %v25 = vsub.f32 %v23, 0.75
    %v26 = vsub.f32 %v24, 0.75
    %v27 = vmul.f32 %v25, 4.0
    %v28 = vmul.f32 %v26, 4.0
    %v29 = vmax.f32 %v27, 0.0
    %v30 = vmax.f32 %v28, 0.0
    %v31 = vmin.f32 %v29, 1.0
    %v32 = vmin.f32 %v30, 1.0
    %v33 = vsub.f32 %v23, 0.25
    %v34 = vsub.f32 %v24, 0.25
    %v35 = vmul.f32 %v33, -4.0
    %v36 = vmul.f32 %v34, -4.0
    %v37 = vmax.f32 %v35, 0.0
    %v38 = vmax.f32 %v36, 0.0
    %v39 = vmin.f32 %v37, 1.0
    %v40 = vmin.f32 %v38, 1.0
    %v41 = vmax.f32 %v31, %v39
    %v42 = vmax.f32 %v32, %v40
    %v43 = vsub.f32 1.0, %v41
    %v44 = vsub.f32 1.0, %v42
    %45 = vst [vmem:[#allocation5] sm:$0xff] %v43
    %46 = vst [vmem:[#allocation5 + $0x8] sm:$0xff] %v44
    // Predicated region
    $region10: #{tpu_custom_call.1} parent=1 // pred_check
      _
    $region11: #{tpu_custom_call.1} parent=1 // pred_check_branch
      %48 = sbr.rel (0) target = $region13
    $region12: #{tpu_custom_call.1} parent=1 // pred_region
      %50 = vsyncadd [#allocation4], 0
      %s52 = sshll.u32 [#allocation5], 4
      %s53 = int_to_ptr.vmem [resolvable:$true] %s52
      %s54 = sshll.u32 %s1, 4
      %s55 = int_to_ptr.hbm [resolvable:$true] %s54
      %57 = dma.vmem_to_hbm [thread:$0]  %s53, 256, %s55, [#allocation4]
    $region13: #{tpu_custom_call.1} parent=1 // pred_fallthru
      _
    // Predicated region
    $region14: #{tpu_custom_call.1} parent=1 // pred_check
      _
    $region15: #{tpu_custom_call.1} parent=1 // pred_check_branch
      %59 = sbr.rel (0) target = $region17
    $region16: #{tpu_custom_call.1} parent=1 // pred_region
      %61 = dma.done [#allocation4], 256
    $region17: #{tpu_custom_call.1} parent=1 // pred_fallthru
      _
    %62 = vsyncpa [#allocation3], 1
    %63 = vsyncpa [#allocation4], 1

</llo_original>
